<compile_context>
chip_gen: v7x
topology: tpu7x:2x2x1
jax: 0.10.0
libtpu: 0.0.40
codegen_flags: <defaults>
</compile_context>

<pallas_src>
import math

import jax
import jax.numpy as jnp
from jax import lax
from jax.experimental import pallas as pl
from jax.experimental.pallas import tpu as pltpu  # noqa: F401  (TPU backend)

# ---- problem sizes (small, consistent with the module) ----
BATCH = 2
SEQ = 8
NDIM = 32
NHEAD = 4
HEAD_DIM = NDIM // NHEAD
FF = NDIM * 4
EPS = 1e-12

assert SEQ & (SEQ - 1) == 0 and HEAD_DIM & (HEAD_DIM - 1) == 0
_SHIFT_L = int(math.log2(SEQ))        # group size along score columns
_SHIFT_D = int(math.log2(HEAD_DIM))   # group size along feature columns

# packed-weight lane offsets (all 128-aligned)
_OFF_WQK = 0          # (NDIM, 2*NDIM)
_OFF_WV = 128         # (NDIM, NDIM)
_OFF_WP = 256         # (NDIM, NDIM)
_OFF_W1 = 384         # (NDIM, FF)
_WPACK_LANES = 512


# ---------------- in-kernel helpers ----------------
def _layernorm(x, gamma, beta):
    mu = jnp.mean(x, axis=-1, keepdims=True)
    var = jnp.mean((x - mu) ** 2, axis=-1, keepdims=True)
    return (x - mu) * lax.rsqrt(var + EPS) * gamma + beta


def _gelu_exact(x):
    # nn.GELU default = exact erf-based GELU
    return 0.5 * x * (1.0 + lax.erf(x * (1.0 / math.sqrt(2.0))))


# ---------------- Pallas kernel (single invocation, whole batch) ----------------
def self_attention_kernel(src_ref, pos_ref, w_ref, w2_ref, misc_ref, out_ref):
    C = NDIM
    L = SEQ
    HL = NHEAD * SEQ

    x = src_ref[...]                          # (B*L, C) = (16, 32)
    qk_in = x + pos_ref[...]                  # q = k = with_pos_embed(src, src_pos)

    # ---- packed parameter slices (static, 128-aligned lane starts) ----
    w_qk = w_ref[:, _OFF_WQK:_OFF_WQK + 2 * C]   # (32, 64)  [Wq^T*scale | Wk^T]
    w_v = w_ref[:, _OFF_WV:_OFF_WV + C]          # (32, 32)
    w_p = w_ref[:, _OFF_WP:_OFF_WP + C]          # (32, 32)
    w_1 = w_ref[:, _OFF_W1:_OFF_W1 + FF]         # (32, 128)
    w_2 = w2_ref[...]                            # (128, 32)

    b_qk = misc_ref[0:1, 0:2 * C]                # (1, 64)
    b_v = misc_ref[1:2, 0:C]
    b_p = misc_ref[2:3, 0:C]
    g1 = misc_ref[3:4, 0:C]
    be1 = misc_ref[4:5, 0:C]
    b_1 = misc_ref[5:6, 0:FF]
    b_2 = misc_ref[6:7, 0:C]
    g2 = misc_ref[7:8, 0:C]
    be2 = misc_ref[8:9, 0:C]

    # ---- fused Q/K projection (1/sqrt(D) folded into Wq/bq) + V projection ----
    qk = jnp.dot(qk_in, w_qk, preferred_element_type=jnp.float32) + b_qk
    v = jnp.dot(x, w_v, preferred_element_type=jnp.float32) + b_v
    q = qk[:, 0:C]          # already scaled
    k = qk[:, C:2 * C]

    # ---- block-diagonal masks (constants from iota + shifts; no DMA) ----
    # kv_mask[j, c] = 1 iff key-row j (head j>>log2(L)) matches feature c's head.
    row_ids = lax.broadcasted_iota(jnp.int32, (HL, C), 0)
    col_ids = lax.broadcasted_iota(jnp.int32, (HL, C), 1)
    kv_mask = jnp.where((row_ids >> _SHIFT_L) == (col_ids >> _SHIFT_D), 1.0, 0.0)
    # seg_sum[j, j'] = 1 iff score columns j, j' belong to the same head
    r2 = lax.broadcasted_iota(jnp.int32, (HL, HL), 0)
    c2 = lax.broadcasted_iota(jnp.int32, (HL, HL), 1)
    seg_sum = jnp.where((r2 >> _SHIFT_L) == (c2 >> _SHIFT_L), 1.0, 0.0)

    # ---- attention: lane-dense (L, H*L) scores, free head merge ----
    nt_dims = (((1,), (1,)), ((), ()))     # contract minor dims: Q_b @ Kexp^T
    scores = []
    for b in range(BATCH):
        qb = q[b * L:(b + 1) * L, :]                                   # (8, 32)
        kb = k[b * L:(b + 1) * L, :]                                   # (8, 32)
        kexp = jnp.concatenate([kb] * NHEAD, axis=0) * kv_mask         # (32, 32)
        scores.append(lax.dot_general(qb, kexp, nt_dims,
                                      preferred_element_type=jnp.float32))
    s = jnp.concatenate(scores, axis=0)                                # (16, 32)

    # per-row shift: same constant inside every head group -> softmax-invariant
    s = s - jnp.max(s, axis=-1, keepdims=True)
    p = jnp.exp(s)
    # per-head segment sums via one MXU matmul; exact divide (no approx recip)
    denom = jnp.dot(p, seg_sum, preferred_element_type=jnp.float32)
    p = p / denom

    ys = []
    for b in range(BATCH):
        pb = p[b * L:(b + 1) * L, :]                                   # (8, 32)
        vb = v[b * L:(b + 1) * L, :]                                   # (8, 32)
        vop = jnp.concatenate([vb] * NHEAD, axis=0) * kv_mask          # (32, 32)
        ys.append(jnp.dot(pb, vop, preferred_element_type=jnp.float32))
    y = jnp.concatenate(ys, axis=0)        # (16, 32), heads already merged

    # ---- output projection, residual + LayerNorm1 (dropout1 = identity) ----
    y = jnp.dot(y, w_p, preferred_element_type=jnp.float32) + b_p
    s1 = _layernorm(x + y, g1, be1)

    # ---- feed-forward: linear2(gelu(linear1(s1))) ----
    h1 = jnp.dot(s1, w_1, preferred_element_type=jnp.float32) + b_1
    h1 = _gelu_exact(h1)
    ff = jnp.dot(h1, w_2, preferred_element_type=jnp.float32) + b_2

    # ---- residual + LayerNorm2 (dropout2 = identity) ----
    out_ref[...] = _layernorm(s1 + ff, g2, be2)


# ---------------- host-side parameter packing ----------------
def pack_params(p):
    """Fuse Q/K, pre-transpose all weights, fold 1/sqrt(D), pack into 3 arrays."""
    scale = 1.0 / math.sqrt(HEAD_DIM)

    w_pack = jnp.zeros((NDIM, _WPACK_LANES), jnp.float32)
    w_pack = w_pack.at[:, _OFF_WQK:_OFF_WQK + NDIM].set((p["wq"] * scale).T)
    w_pack = w_pack.at[:, _OFF_WQK + NDIM:_OFF_WQK + 2 * NDIM].set(p["wk"].T)
    w_pack = w_pack.at[:, _OFF_WV:_OFF_WV + NDIM].set(p["wv"].T)
    w_pack = w_pack.at[:, _OFF_WP:_OFF_WP + NDIM].set(p["wp"].T)
    w_pack = w_pack.at[:, _OFF_W1:_OFF_W1 + FF].set(p["w1"].T)

    w2_pack = p["w2"].T                                  # (FF, NDIM) = (128, 32)

    misc = jnp.zeros((16, 128), jnp.float32)
    misc = misc.at[0, 0:NDIM].set((p["bq"] * scale).reshape(-1))
    misc = misc.at[0, NDIM:2 * NDIM].set(p["bk"].reshape(-1))
    misc = misc.at[1, 0:NDIM].set(p["bv"].reshape(-1))
    misc = misc.at[2, 0:NDIM].set(p["bp"].reshape(-1))
    misc = misc.at[3, 0:NDIM].set(p["g1"].reshape(-1))
    misc = misc.at[4, 0:NDIM].set(p["be1"].reshape(-1))
    misc = misc.at[5, 0:FF].set(p["b1"].reshape(-1))
    misc = misc.at[6, 0:NDIM].set(p["b2"].reshape(-1))
    misc = misc.at[7, 0:NDIM].set(p["g2"].reshape(-1))
    misc = misc.at[8, 0:NDIM].set(p["be2"].reshape(-1))
    return w_pack, w2_pack, misc


# ---------------- wrapper ----------------
def self_attention_forward(src, src_pos, params):
    B, L, C = src.shape
    w_pack, w2_pack, misc = pack_params(params)
    # Single gridless invocation: 5 operands (~120 KiB total) land whole in VMEM.
    out2d = pl.pallas_call(
        self_attention_kernel,
        out_shape=jax.ShapeDtypeStruct((B * L, C), jnp.float32),
    )(src.reshape(B * L, C), src_pos.reshape(B * L, C), w_pack, w2_pack, misc)
    return out2d.reshape(B, L, C)


# ---------------- pure-JAX reference (for verification) ----------------
def reference_forward(src, src_pos, p):
    B, L, C = src.shape
    x = src
    qk = x + src_pos
    q = qk @ p["wq"].T + p["bq"]
    k = qk @ p["wk"].T + p["bk"]
    v = x @ p["wv"].T + p["bv"]

    def split_heads(t):
        return t.reshape(B, L, NHEAD, HEAD_DIM).transpose(0, 2, 1, 3)

    qh, kh, vh = split_heads(q), split_heads(k), split_heads(v)
    att = jnp.einsum("bhqd,bhkd->bhqk", qh, kh) * (1.0 / math.sqrt(HEAD_DIM))
    att = jax.nn.softmax(att, axis=-1)
    y = jnp.einsum("bhqk,bhkd->bhqd", att, vh)
    y = y.transpose(0, 2, 1, 3).reshape(B, L, C)
    y = y @ p["wp"].T + p["bp"]

    def ln(t, g, b):
        mu = jnp.mean(t, axis=-1, keepdims=True)
        var = jnp.mean((t - mu) ** 2, axis=-1, keepdims=True)
        return (t - mu) / jnp.sqrt(var + EPS) * g + b

    s1 = ln(x + y, p["g1"], p["be1"])
    h1 = jax.nn.gelu(s1 @ p["w1"].T + p["b1"], approximate=False)
    ff = h1 @ p["w2"].T + p["b2"]
    return ln(s1 + ff, p["g2"], p["be2"])


# ---------------- parameter init ----------------
def init_params(key):
    ks = jax.random.split(key, 8)
    s = 0.02
    return {
        "wq": jax.random.normal(ks[0], (NDIM, NDIM), jnp.float32) * s,
        "bq": jnp.zeros((1, NDIM), jnp.float32),
        "wk": jax.random.normal(ks[1], (NDIM, NDIM), jnp.float32) * s,
        "bk": jnp.zeros((1, NDIM), jnp.float32),
        "wv": jax.random.normal(ks[2], (NDIM, NDIM), jnp.float32) * s,
        "bv": jnp.zeros((1, NDIM), jnp.float32),
        "wp": jax.random.normal(ks[3], (NDIM, NDIM), jnp.float32) * s,
        "bp": jnp.zeros((1, NDIM), jnp.float32),
        "g1": jnp.ones((1, NDIM), jnp.float32),
        "be1": jnp.zeros((1, NDIM), jnp.float32),
        "w1": jax.random.normal(ks[4], (FF, NDIM), jnp.float32) * s,
        "b1": jax.random.normal(ks[5], (1, FF), jnp.float32) * s,
        "w2": jax.random.normal(ks[6], (NDIM, FF), jnp.float32) * s,
        "b2": jax.random.normal(ks[7], (1, NDIM), jnp.float32) * s,
        "g2": jnp.ones((1, NDIM), jnp.float32),
        "be2": jnp.zeros((1, NDIM), jnp.float32),
    }


if __name__ == "__main__":
    key = jax.random.PRNGKey(0)
    k_src, k_pos, k_param = jax.random.split(key, 3)

    src = jax.random.normal(k_src, (BATCH, SEQ, NDIM), jnp.float32)
    src_pos = jax.random.normal(k_pos, (BATCH, SEQ, NDIM), jnp.float32)
    params = init_params(k_param)

    out = self_attention_forward(src, src_pos, params)
    out = jax.block_until_ready(out)

    # highest-precision reference (otherwise XLA's default bf16 matmul passes
    # would dominate the comparison error)
    with jax.default_matmul_precision("highest"):
        ref = reference_forward(src, src_pos, params)
    ref = jax.block_until_ready(ref)

    assert out.shape == (BATCH, SEQ, NDIM)
    # exact softmax divide -> tight parity; margin only for exp/erf impl diffs
    assert jnp.allclose(out, ref, atol=1e-4, rtol=1e-4), "mismatch vs reference"

    print("KERNEL_OK")
</pallas_src>

<mosaic_0001>
module attributes {stable_mosaic.version = 11 : i64} {
  func.func @self_attention_kernel(%arg0: memref<16x32xf32, #tpu.memory_space<vmem>>, %arg1: memref<16x32xf32, #tpu.memory_space<vmem>>, %arg2: memref<32x512xf32, #tpu.memory_space<vmem>>, %arg3: memref<128x32xf32, #tpu.memory_space<vmem>>, %arg4: memref<16x128xf32, #tpu.memory_space<vmem>>, %arg5: memref<16x32xf32, #tpu.memory_space<vmem>>) attributes {dimension_semantics = [], scalar_prefetch = 0 : i64, scratch_operands = 0 : i64, tpu.core_type = #tpu.core_type<tc>} {
    %c0 = arith.constant 0 : index
    %c0_0 = arith.constant 0 : index
    %0 = vector.load %arg0[%c0, %c0_0] : memref<16x32xf32, #tpu.memory_space<vmem>>, vector<16x32xf32>
    %c0_1 = arith.constant 0 : index
    %c0_2 = arith.constant 0 : index
    %1 = vector.load %arg1[%c0_1, %c0_2] : memref<16x32xf32, #tpu.memory_space<vmem>>, vector<16x32xf32>
    %2 = arith.addf %0, %1 : vector<16x32xf32>
    %c0_3 = arith.constant 0 : index
    %c0_4 = arith.constant 0 : index
    %3 = vector.load %arg2[%c0_3, %c0_4] : memref<32x512xf32, #tpu.memory_space<vmem>>, vector<32x64xf32>
    %c0_5 = arith.constant 0 : index
    %c128 = arith.constant 128 : index
    %4 = vector.load %arg2[%c0_5, %c128] : memref<32x512xf32, #tpu.memory_space<vmem>>, vector<32x32xf32>
    %c0_6 = arith.constant 0 : index
    %c256 = arith.constant 256 : index
    %5 = vector.load %arg2[%c0_6, %c256] : memref<32x512xf32, #tpu.memory_space<vmem>>, vector<32x32xf32>
    %c0_7 = arith.constant 0 : index
    %c384 = arith.constant 384 : index
    %6 = vector.load %arg2[%c0_7, %c384] : memref<32x512xf32, #tpu.memory_space<vmem>>, vector<32x128xf32>
    %c0_8 = arith.constant 0 : index
    %c0_9 = arith.constant 0 : index
    %7 = vector.load %arg3[%c0_8, %c0_9] : memref<128x32xf32, #tpu.memory_space<vmem>>, vector<128x32xf32>
    %c0_10 = arith.constant 0 : index
    %c0_11 = arith.constant 0 : index
    %8 = vector.load %arg4[%c0_10, %c0_11] : memref<16x128xf32, #tpu.memory_space<vmem>>, vector<1x64xf32>
    %c1 = arith.constant 1 : index
    %c0_12 = arith.constant 0 : index
    %9 = vector.load %arg4[%c1, %c0_12] : memref<16x128xf32, #tpu.memory_space<vmem>>, vector<1x32xf32>
    %c2 = arith.constant 2 : index
    %c0_13 = arith.constant 0 : index
    %10 = vector.load %arg4[%c2, %c0_13] : memref<16x128xf32, #tpu.memory_space<vmem>>, vector<1x32xf32>
    %c3 = arith.constant 3 : index
    %c0_14 = arith.constant 0 : index
    %11 = vector.load %arg4[%c3, %c0_14] : memref<16x128xf32, #tpu.memory_space<vmem>>, vector<1x32xf32>
    %c4 = arith.constant 4 : index
    %c0_15 = arith.constant 0 : index
    %12 = vector.load %arg4[%c4, %c0_15] : memref<16x128xf32, #tpu.memory_space<vmem>>, vector<1x32xf32>
    %c5 = arith.constant 5 : index
    %c0_16 = arith.constant 0 : index
    %13 = vector.load %arg4[%c5, %c0_16] : memref<16x128xf32, #tpu.memory_space<vmem>>, vector<1x128xf32>
    %c6 = arith.constant 6 : index
    %c0_17 = arith.constant 0 : index
    %14 = vector.load %arg4[%c6, %c0_17] : memref<16x128xf32, #tpu.memory_space<vmem>>, vector<1x32xf32>
    %c7 = arith.constant 7 : index
    %c0_18 = arith.constant 0 : index
    %15 = vector.load %arg4[%c7, %c0_18] : memref<16x128xf32, #tpu.memory_space<vmem>>, vector<1x32xf32>
    %c8 = arith.constant 8 : index
    %c0_19 = arith.constant 0 : index
    %16 = vector.load %arg4[%c8, %c0_19] : memref<16x128xf32, #tpu.memory_space<vmem>>, vector<1x32xf32>
    %cst = arith.constant dense<0.000000e+00> : vector<16x64xf32>
    %17 = tpu.matmul %2, %3, %cst {dimension_numbers = #tpu.dot_dimension_numbers<[1], [0], [0], [1], [0, 0, 1, 1], [], []>} : vector<16x32xf32>, vector<32x64xf32>, vector<16x64xf32> -> vector<16x64xf32>
    %18 = vector.broadcast %8 : vector<1x64xf32> to vector<16x64xf32>
    %19 = arith.addf %17, %18 : vector<16x64xf32>
    %cst_20 = arith.constant dense<0.000000e+00> : vector<16x32xf32>
    %20 = tpu.matmul %0, %4, %cst_20 {dimension_numbers = #tpu.dot_dimension_numbers<[1], [0], [0], [1], [0, 0, 1, 1], [], []>} : vector<16x32xf32>, vector<32x32xf32>, vector<16x32xf32> -> vector<16x32xf32>
    %21 = vector.broadcast %9 : vector<1x32xf32> to vector<16x32xf32>
    %22 = arith.addf %20, %21 : vector<16x32xf32>
    %23 = vector.extract_strided_slice %19 {offsets = [0, 0], sizes = [16, 32], strides = [1, 1]} : vector<16x64xf32> to vector<16x32xf32>
    %24 = vector.extract_strided_slice %19 {offsets = [0, 32], sizes = [16, 32], strides = [1, 1]} : vector<16x64xf32> to vector<16x32xf32>
    %25 = tpu.iota {dimensions = array<i32: 0>} : vector<32x32xi32>
    %26 = tpu.iota {dimensions = array<i32: 1>} : vector<32x32xi32>
    %c3_i32 = arith.constant 3 : i32
    %27 = vector.broadcast %c3_i32 : i32 to vector<32x32xi32>
    %28 = arith.shrsi %25, %27 : vector<32x32xi32>
    %c3_i32_21 = arith.constant 3 : i32
    %29 = vector.broadcast %c3_i32_21 : i32 to vector<32x32xi32>
    %30 = arith.shrsi %26, %29 : vector<32x32xi32>
    %31 = arith.cmpi eq, %28, %30 : vector<32x32xi32>
    %cst_22 = arith.constant 1.000000e+00 : f32
    %cst_23 = arith.constant 0.000000e+00 : f32
    %32 = vector.broadcast %cst_22 : f32 to vector<32x32xf32>
    %33 = vector.broadcast %cst_23 : f32 to vector<32x32xf32>
    %34 = arith.select %31, %32, %33 : vector<32x32xi1>, vector<32x32xf32>
    %35 = tpu.iota {dimensions = array<i32: 0>} : vector<32x32xi32>
    %36 = tpu.iota {dimensions = array<i32: 1>} : vector<32x32xi32>
    %c3_i32_24 = arith.constant 3 : i32
    %37 = vector.broadcast %c3_i32_24 : i32 to vector<32x32xi32>
    %38 = arith.shrsi %35, %37 : vector<32x32xi32>
    %c3_i32_25 = arith.constant 3 : i32
    %39 = vector.broadcast %c3_i32_25 : i32 to vector<32x32xi32>
    %40 = arith.shrsi %36, %39 : vector<32x32xi32>
    %41 = arith.cmpi eq, %38, %40 : vector<32x32xi32>
    %cst_26 = arith.constant 1.000000e+00 : f32
    %cst_27 = arith.constant 0.000000e+00 : f32
    %42 = vector.broadcast %cst_26 : f32 to vector<32x32xf32>
    %43 = vector.broadcast %cst_27 : f32 to vector<32x32xf32>
    %44 = arith.select %41, %42, %43 : vector<32x32xi1>, vector<32x32xf32>
    %45 = vector.extract_strided_slice %23 {offsets = [0, 0], sizes = [8, 32], strides = [1, 1]} : vector<16x32xf32> to vector<8x32xf32>
    %46 = vector.extract_strided_slice %24 {offsets = [0, 0], sizes = [8, 32], strides = [1, 1]} : vector<16x32xf32> to vector<8x32xf32>
    %47 = tpu.concatenate %46, %46, %46, %46 in 0 : vector<8x32xf32>, vector<8x32xf32>, vector<8x32xf32>, vector<8x32xf32> -> vector<32x32xf32>
    %48 = arith.mulf %47, %34 : vector<32x32xf32>
    %cst_28 = arith.constant dense<0.000000e+00> : vector<8x32xf32>
    %49 = tpu.matmul %45, %48, %cst_28 {dimension_numbers = #tpu.dot_dimension_numbers<[1], [1], [0], [0], [0, 0, 1, 0], [], []>} : vector<8x32xf32>, vector<32x32xf32>, vector<8x32xf32> -> vector<8x32xf32>
    %50 = vector.extract_strided_slice %23 {offsets = [8, 0], sizes = [8, 32], strides = [1, 1]} : vector<16x32xf32> to vector<8x32xf32>
    %51 = vector.extract_strided_slice %24 {offsets = [8, 0], sizes = [8, 32], strides = [1, 1]} : vector<16x32xf32> to vector<8x32xf32>
    %52 = tpu.concatenate %51, %51, %51, %51 in 0 : vector<8x32xf32>, vector<8x32xf32>, vector<8x32xf32>, vector<8x32xf32> -> vector<32x32xf32>
    %53 = arith.mulf %52, %34 : vector<32x32xf32>
    %cst_29 = arith.constant dense<0.000000e+00> : vector<8x32xf32>
    %54 = tpu.matmul %50, %53, %cst_29 {dimension_numbers = #tpu.dot_dimension_numbers<[1], [1], [0], [0], [0, 0, 1, 0], [], []>} : vector<8x32xf32>, vector<32x32xf32>, vector<8x32xf32> -> vector<8x32xf32>
    %55 = tpu.concatenate %49, %54 in 0 : vector<8x32xf32>, vector<8x32xf32> -> vector<16x32xf32>
    %cst_30 = arith.constant dense<0xFF800000> : vector<16xf32>
    %56 = vector.multi_reduction <maximumf>, %55, %cst_30 [1] : vector<16x32xf32> to vector<16xf32>
    %57 = vector.shape_cast %56 : vector<16xf32> to vector<16x1xf32>
    %58 = vector.broadcast %57 : vector<16x1xf32> to vector<16x32xf32>
    %59 = arith.subf %55, %58 : vector<16x32xf32>
    %60 = math.exp %59 : vector<16x32xf32>
    %cst_31 = arith.constant dense<0.000000e+00> : vector<16x32xf32>
    %61 = tpu.matmul %60, %44, %cst_31 {dimension_numbers = #tpu.dot_dimension_numbers<[1], [0], [0], [1], [0, 0, 1, 1], [], []>} : vector<16x32xf32>, vector<32x32xf32>, vector<16x32xf32> -> vector<16x32xf32>
    %62 = arith.divf %60, %61 : vector<16x32xf32>
    %63 = vector.extract_strided_slice %62 {offsets = [0, 0], sizes = [8, 32], strides = [1, 1]} : vector<16x32xf32> to vector<8x32xf32>
    %64 = vector.extract_strided_slice %22 {offsets = [0, 0], sizes = [8, 32], strides = [1, 1]} : vector<16x32xf32> to vector<8x32xf32>
    %65 = tpu.concatenate %64, %64, %64, %64 in 0 : vector<8x32xf32>, vector<8x32xf32>, vector<8x32xf32>, vector<8x32xf32> -> vector<32x32xf32>
    %66 = arith.mulf %65, %34 : vector<32x32xf32>
    %cst_32 = arith.constant dense<0.000000e+00> : vector<8x32xf32>
    %67 = tpu.matmul %63, %66, %cst_32 {dimension_numbers = #tpu.dot_dimension_numbers<[1], [0], [0], [1], [0, 0, 1, 1], [], []>} : vector<8x32xf32>, vector<32x32xf32>, vector<8x32xf32> -> vector<8x32xf32>
    %68 = vector.extract_strided_slice %62 {offsets = [8, 0], sizes = [8, 32], strides = [1, 1]} : vector<16x32xf32> to vector<8x32xf32>
    %69 = vector.extract_strided_slice %22 {offsets = [8, 0], sizes = [8, 32], strides = [1, 1]} : vector<16x32xf32> to vector<8x32xf32>
    %70 = tpu.concatenate %69, %69, %69, %69 in 0 : vector<8x32xf32>, vector<8x32xf32>, vector<8x32xf32>, vector<8x32xf32> -> vector<32x32xf32>
    %71 = arith.mulf %70, %34 : vector<32x32xf32>
    %cst_33 = arith.constant dense<0.000000e+00> : vector<8x32xf32>
    %72 = tpu.matmul %68, %71, %cst_33 {dimension_numbers = #tpu.dot_dimension_numbers<[1], [0], [0], [1], [0, 0, 1, 1], [], []>} : vector<8x32xf32>, vector<32x32xf32>, vector<8x32xf32> -> vector<8x32xf32>
    %73 = tpu.concatenate %67, %72 in 0 : vector<8x32xf32>, vector<8x32xf32> -> vector<16x32xf32>
    %cst_34 = arith.constant dense<0.000000e+00> : vector<16x32xf32>
    %74 = tpu.matmul %73, %5, %cst_34 {dimension_numbers = #tpu.dot_dimension_numbers<[1], [0], [0], [1], [0, 0, 1, 1], [], []>} : vector<16x32xf32>, vector<32x32xf32>, vector<16x32xf32> -> vector<16x32xf32>
    %75 = vector.broadcast %10 : vector<1x32xf32> to vector<16x32xf32>
    %76 = arith.addf %74, %75 : vector<16x32xf32>
    %77 = arith.addf %0, %76 : vector<16x32xf32>
    %cst_35 = arith.constant dense<0.000000e+00> : vector<16xf32>
    %78 = vector.multi_reduction <add>, %77, %cst_35 [1] : vector<16x32xf32> to vector<16xf32>
    %79 = vector.shape_cast %78 : vector<16xf32> to vector<16x1xf32>
    %cst_36 = arith.constant 3.200000e+01 : f32
    %80 = vector.broadcast %cst_36 : f32 to vector<16x1xf32>
    %81 = arith.divf %79, %80 : vector<16x1xf32>
    %82 = vector.broadcast %81 : vector<16x1xf32> to vector<16x32xf32>
    %83 = arith.subf %77, %82 : vector<16x32xf32>
    %84 = arith.mulf %83, %83 : vector<16x32xf32>
    %cst_37 = arith.constant dense<0.000000e+00> : vector<16xf32>
    %85 = vector.multi_reduction <add>, %84, %cst_37 [1] : vector<16x32xf32> to vector<16xf32>
    %86 = vector.shape_cast %85 : vector<16xf32> to vector<16x1xf32>
    %cst_38 = arith.constant 3.200000e+01 : f32
    %87 = vector.broadcast %cst_38 : f32 to vector<16x1xf32>
    %88 = arith.divf %86, %87 : vector<16x1xf32>
    %89 = vector.broadcast %81 : vector<16x1xf32> to vector<16x32xf32>
    %90 = arith.subf %77, %89 : vector<16x32xf32>
    %cst_39 = arith.constant 9.99999996E-13 : f32
    %91 = vector.broadcast %cst_39 : f32 to vector<16x1xf32>
    %92 = arith.addf %88, %91 : vector<16x1xf32>
    %93 = math.rsqrt %92 : vector<16x1xf32>
    %94 = vector.broadcast %93 : vector<16x1xf32> to vector<16x32xf32>
    %95 = arith.mulf %90, %94 : vector<16x32xf32>
    %96 = vector.broadcast %11 : vector<1x32xf32> to vector<16x32xf32>
    %97 = arith.mulf %95, %96 : vector<16x32xf32>
    %98 = vector.broadcast %12 : vector<1x32xf32> to vector<16x32xf32>
    %99 = arith.addf %97, %98 : vector<16x32xf32>
    %cst_40 = arith.constant dense<0.000000e+00> : vector<16x128xf32>
    %100 = tpu.matmul %99, %6, %cst_40 {dimension_numbers = #tpu.dot_dimension_numbers<[1], [0], [0], [1], [0, 0, 1, 1], [], []>} : vector<16x32xf32>, vector<32x128xf32>, vector<16x128xf32> -> vector<16x128xf32>
    %101 = vector.broadcast %13 : vector<1x128xf32> to vector<16x128xf32>
    %102 = arith.addf %100, %101 : vector<16x128xf32>
    %cst_41 = arith.constant 5.000000e-01 : f32
    %103 = vector.broadcast %cst_41 : f32 to vector<16x128xf32>
    %104 = arith.mulf %103, %102 : vector<16x128xf32>
    %cst_42 = arith.constant 0.707106769 : f32
    %105 = vector.broadcast %cst_42 : f32 to vector<16x128xf32>
    %106 = arith.mulf %102, %105 : vector<16x128xf32>
    %107 = math.erf %106 : vector<16x128xf32>
    %cst_43 = arith.constant 1.000000e+00 : f32
    %108 = vector.broadcast %cst_43 : f32 to vector<16x128xf32>
    %109 = arith.addf %108, %107 : vector<16x128xf32>
    %110 = arith.mulf %104, %109 : vector<16x128xf32>
    %cst_44 = arith.constant dense<0.000000e+00> : vector<16x32xf32>
    %111 = tpu.matmul %110, %7, %cst_44 {dimension_numbers = #tpu.dot_dimension_numbers<[1], [0], [0], [1], [0, 0, 1, 1], [], []>} : vector<16x128xf32>, vector<128x32xf32>, vector<16x32xf32> -> vector<16x32xf32>
    %112 = vector.broadcast %14 : vector<1x32xf32> to vector<16x32xf32>
    %113 = arith.addf %111, %112 : vector<16x32xf32>
    %114 = arith.addf %99, %113 : vector<16x32xf32>
    %cst_45 = arith.constant dense<0.000000e+00> : vector<16xf32>
    %115 = vector.multi_reduction <add>, %114, %cst_45 [1] : vector<16x32xf32> to vector<16xf32>
    %116 = vector.shape_cast %115 : vector<16xf32> to vector<16x1xf32>
    %cst_46 = arith.constant 3.200000e+01 : f32
    %117 = vector.broadcast %cst_46 : f32 to vector<16x1xf32>
    %118 = arith.divf %116, %117 : vector<16x1xf32>
    %119 = vector.broadcast %118 : vector<16x1xf32> to vector<16x32xf32>
    %120 = arith.subf %114, %119 : vector<16x32xf32>
    %121 = arith.mulf %120, %120 : vector<16x32xf32>
    %cst_47 = arith.constant dense<0.000000e+00> : vector<16xf32>
    %122 = vector.multi_reduction <add>, %121, %cst_47 [1] : vector<16x32xf32> to vector<16xf32>
    %123 = vector.shape_cast %122 : vector<16xf32> to vector<16x1xf32>
    %cst_48 = arith.constant 3.200000e+01 : f32
    %124 = vector.broadcast %cst_48 : f32 to vector<16x1xf32>
    %125 = arith.divf %123, %124 : vector<16x1xf32>
    %126 = vector.broadcast %118 : vector<16x1xf32> to vector<16x32xf32>
    %127 = arith.subf %114, %126 : vector<16x32xf32>
    %cst_49 = arith.constant 9.99999996E-13 : f32
    %128 = vector.broadcast %cst_49 : f32 to vector<16x1xf32>
    %129 = arith.addf %125, %128 : vector<16x1xf32>
    %130 = math.rsqrt %129 : vector<16x1xf32>
    %131 = vector.broadcast %130 : vector<16x1xf32> to vector<16x32xf32>
    %132 = arith.mulf %127, %131 : vector<16x32xf32>
    %133 = vector.broadcast %15 : vector<1x32xf32> to vector<16x32xf32>
    %134 = arith.mulf %132, %133 : vector<16x32xf32>
    %135 = vector.broadcast %16 : vector<1x32xf32> to vector<16x32xf32>
    %136 = arith.addf %134, %135 : vector<16x32xf32>
    %c0_50 = arith.constant 0 : index
    %c0_51 = arith.constant 0 : index
    %137 = vector.load %arg5[%c0_50, %c0_51] : memref<16x32xf32, #tpu.memory_space<vmem>>, vector<16x32xf32>
    tpu.vector_store %arg5[%c0_50, %c0_51], %136 {strides = array<i32>} : memref<16x32xf32, #tpu.memory_space<vmem>>, vector<16x32xf32>,
    return
  }
}

</mosaic_0001>

<llo_original>
// kernel: tpu_custom_call.1
$region0: #{tpu_custom_call.1}
  #allocation0 [shape = 'u32[]', space=smem, size = 0x4, offset = 0x4, fixed_abs, tag = 'smem constant byte address 0x4 - core index']
  #allocation1 [shape = 'u32[144,128]{1,0:T(1,128)}', space=vmem, size = 0x12000, scoped, tag = 'internal scratch']
  %s0 = inlined_call_operand.vmem [shape: f32[16,32], index: 0, kind: input, shape index: {}]
  %s1 = inlined_call_operand.vmem [shape: f32[16,32], index: 1, kind: input, shape index: {}]
  %s2 = inlined_call_operand.vmem [shape: f32[32,512], index: 2, kind: input, shape index: {}]
  %s3 = inlined_call_operand.vmem [shape: f32[128,32], index: 3, kind: input, shape index: {}]
  %s4 = inlined_call_operand.hbm [shape: f32[16,128], index: 4, kind: input, shape index: {}]
  %s5 = inlined_call_operand.hbm [shape: f32[16,32], index: 5, kind: output, shape index: {}]
  %s6 = sld [smem:[#allocation0]]
  $region34: #{tpu_custom_call.1} parent=0
    _
  %s8 = ssub.s32 1, %s6
  %s9 = scalar_select 0, %s8, %s6
  $region1: #{tpu_custom_call.1} parent=0
    #allocation2 [shape = 'u8[8192]{0}', space=vmem, size = 0x2000, scoped, tag = 'input window, operand 4, single buffered']
    #allocation3 [shape = 's32[1]{0}', space=sflag, size = 0x4, scoped, tag = 'scoped memory for tpu_custom_call.1']
    #allocation4 [shape = 's32[1]{0}', space=sflag, size = 0x4, scoped, tag = 'scoped memory for tpu_custom_call.1']
    #allocation5 [shape = 'u8[8192]{0}', space=vmem, size = 0x2000, scoped, tag = 'output window, operand 0, single buffered']
    %10 = vsyncpa [#allocation3], 0
    %11 = vsyncpa [#allocation4], 0
    // Predicated region
    $region2: #{tpu_custom_call.1} parent=1 // pred_check
      _
    $region3: #{tpu_custom_call.1} parent=1 // pred_check_branch
      %13 = sbr.rel (0) target = $region5
    $region4: #{tpu_custom_call.1} parent=1 // pred_region
      _
    $region5: #{tpu_custom_call.1} parent=1 // pred_fallthru
      _
    // Predicated region
    $region6: #{tpu_custom_call.1} parent=1 // pred_check
      _
    $region7: #{tpu_custom_call.1} parent=1 // pred_check_branch
      %15 = sbr.rel (0) target = $region9
    $region8: #{tpu_custom_call.1} parent=1 // pred_region
      _
    $region9: #{tpu_custom_call.1} parent=1 // pred_fallthru
      _
    // Predicated region
    $region10: #{tpu_custom_call.1} parent=1 // pred_check
      _
    $region11: #{tpu_custom_call.1} parent=1 // pred_check_branch
      %17 = sbr.rel (0) target = $region13
    $region12: #{tpu_custom_call.1} parent=1 // pred_region
      _
    $region13: #{tpu_custom_call.1} parent=1 // pred_fallthru
      _
    // Predicated region
    $region14: #{tpu_custom_call.1} parent=1 // pred_check
      _
    $region15: #{tpu_custom_call.1} parent=1 // pred_check_branch
      %19 = sbr.rel (0) target = $region17
    $region16: #{tpu_custom_call.1} parent=1 // pred_region
      _
    $region17: #{tpu_custom_call.1} parent=1 // pred_fallthru
      _
    // Predicated region
    $region18: #{tpu_custom_call.1} parent=1 // pred_check
      _
    $region19: #{tpu_custom_call.1} parent=1 // pred_check_branch
      %21 = sbr.rel (0) target = $region21
    $region20: #{tpu_custom_call.1} parent=1 // pred_region
      %s23 = ssub.s32 256, 256
      %24 = vsyncadd [#allocation3], %s23
      %s25 = sshll.u32 [#allocation2], 4
      %s26 = int_to_ptr.vmem [resolvable:$true] %s25
      %31 = dma.hbm_to_vmem [thread:$0]  %s4, 256, %s26, [#allocation3], 128, 128, 8
    $region21: #{tpu_custom_call.1} parent=1 // pred_fallthru
      _
    // Predicated region
    $region22: #{tpu_custom_call.1} parent=1 // pred_check
      _
    $region23: #{tpu_custom_call.1} parent=1 // pred_check_branch
      %33 = sbr.rel (0) target = $region25
    $region24: #{tpu_custom_call.1} parent=1 // pred_region
      %34 = dma.done [#allocation3], 256
    $region25: #{tpu_custom_call.1} parent=1 // pred_fallthru
      _
    %v35 = vld [vmem:[%s0] sm:$0xff]
    %v36 = vld [vmem:[%s0 + $0x8] sm:$0xff]
    %v37 = vld [vmem:[%s1] sm:$0xff]
    %v38 = vld [vmem:[%s1 + $0x8] sm:$0xff]
    %v39 = vadd.f32 %v35, %v37
    %v40 = vadd.f32 %v36, %v38
    %v41 = vld [vmem:[%s2] sm:$0xff]
    %v42 = vld [vmem:[%s2 + $0x20] sm:$0xff]
    %v43 = vld [vmem:[%s2 + $0x40] sm:$0xff]
    %v44 = vld [vmem:[%s2 + $0x60] sm:$0xff]
    %v45 = vld [vmem:[%s2 + $0x8] sm:$0xff]
    %v46 = vld [vmem:[%s2 + $0x28] sm:$0xff]
    %v47 = vld [vmem:[%s2 + $0x48] sm:$0xff]
    %v48 = vld [vmem:[%s2 + $0x68] sm:$0xff]
    %v49 = vld [vmem:[%s2 + $0x10] sm:$0xff]
    %v50 = vld [vmem:[%s2 + $0x30] sm:$0xff]
    %v51 = vld [vmem:[%s2 + $0x50] sm:$0xff]
    %v52 = vld [vmem:[%s2 + $0x70] sm:$0xff]
    %v53 = vld [vmem:[%s2 + $0x18] sm:$0xff]
    %v54 = vld [vmem:[%s2 + $0x38] sm:$0xff]
    %v55 = vld [vmem:[%s2 + $0x58] sm:$0xff]
    %v56 = vld [vmem:[%s2 + $0x78] sm:$0xff]
    %v57 = vld [vmem:[%s3] sm:$0xff]
    %v58 = vld [vmem:[%s3 + $0x8] sm:$0xff]
    %v59 = vld [vmem:[%s3 + $0x10] sm:$0xff]
    %v60 = vld [vmem:[%s3 + $0x18] sm:$0xff]
    %v61 = vld [vmem:[%s3 + $0x20] sm:$0xff]
    %v62 = vld [vmem:[%s3 + $0x28] sm:$0xff]
    %v63 = vld [vmem:[%s3 + $0x30] sm:$0xff]
    %v64 = vld [vmem:[%s3 + $0x38] sm:$0xff]
    %v65 = vld [vmem:[%s3 + $0x40] sm:$0xff]
    %v66 = vld [vmem:[%s3 + $0x48] sm:$0xff]
    %v67 = vld [vmem:[%s3 + $0x50] sm:$0xff]
    %v68 = vld [vmem:[%s3 + $0x58] sm:$0xff]
    %v69 = vld [vmem:[%s3 + $0x60] sm:$0xff]
    %v70 = vld [vmem:[%s3 + $0x68] sm:$0xff]
    %v71 = vld [vmem:[%s3 + $0x70] sm:$0xff]
    %v72 = vld [vmem:[%s3 + $0x78] sm:$0xff]
    %v73 = vld [vmem:[#allocation2] sm:$0x1]
    %v74 = vld [vmem:[#allocation2 + $0x1] sm:$0x1]
    %v75 = vld [vmem:[#allocation2 + $0x2] sm:$0x1]
    %v76 = vld [vmem:[#allocation2 + $0x3] sm:$0x1]
    %v77 = vld [vmem:[#allocation2 + $0x4] sm:$0x1]
    %v78 = vld [vmem:[#allocation2 + $0x5] sm:$0x1]
    %v79 = vld [vmem:[#allocation2 + $0x6] sm:$0x1]
    %v80 = vld [vmem:[#allocation2 + $0x7] sm:$0x1]
    %v81 = vld [vmem:[#allocation2 + $0x8] sm:$0x1]
    %v82 = vlaneseq
    %v83 = vshrl.u32 %v82, 7
    %v84 = vsub.s32 0, %v83
    %v85 = vrot.slane %v73, %v84
    %vm86 = vcmask 261120
    %v88 = vsel %vm86, %v39, 0
    %v91 = vsel %vm86, %v40, 0
    %93 = vmatprep.subr.mxu0 0.0
    %94 = vmatpush1.msra.mxu0 %v41
    %95 = vmatprep.subr.mxu0 0.0
    %96 = vmatpush1.msra.mxu0 %v42
    %97 = vmatprep.subr.mxu0 0.0
    %98 = vmatpush1.msra.mxu0 %v43
    %99 = vmatprep.subr.mxu0 0.0
    %100 = vmatpush1.msra.mxu0 %v44
    %101 = vmatprep.subr.mxu0 0.0
    %102 = vmatpush1.msra.mxu0 0.0
    %103 = vmatprep.subr.mxu0 0.0
    %104 = vmatpush1.msra.mxu0 0.0
    %105 = vmatprep.subr.mxu0 0.0
    %106 = vmatpush1.msra.mxu0 0.0
    %107 = vmatprep.subr.mxu0 0.0
    %108 = vmatpush1.msra.mxu0 0.0
    %109 = vmatprep.subr.mxu0 0.0
    %110 = vmatpush1.msra.mxu0 0.0
    %111 = vmatprep.subr.mxu0 0.0
    %112 = vmatpush1.msra.mxu0 0.0
    %113 = vmatprep.subr.mxu0 0.0
    %114 = vmatpush1.msra.mxu0 0.0
    %115 = vmatprep.subr.mxu0 0.0
    %116 = vmatpush1.msra.mxu0 0.0
    %117 = vmatprep.subr.mxu0 0.0
    %118 = vmatpush1.msra.mxu0 0.0
    %119 = vmatprep.subr.mxu0 0.0
    %120 = vmatpush1.msra.mxu0 0.0
    %121 = vmatprep.subr.mxu0 0.0
    %122 = vmatpush1.msra.mxu0 0.0
    %123 = vmatprep.subr.mxu0 0.0
    %124 = vmatpush1.msra.mxu0 0.0
    %125 = vmatprep.subr.mxu0 0.0
    %126 = vmatpush1.msra.mxu0 0.0
    %127 = vmatprep.subr.mxu0 0.0
    %128 = vmatpush1.msra.mxu0 0.0
    %129 = vmatprep.subr.mxu0 0.0
    %130 = vmatpush1.msra.mxu0 0.0
    %131 = vmatprep.subr.mxu0 0.0
    %132 = vmatpush1.msra.mxu0 0.0
    %133 = vmatprep.subr.mxu0 0.0
    %134 = vmatpush1.msra.mxu0 0.0
    %135 = vmatprep.subr.mxu0 0.0
    %136 = vmatpush1.msra.mxu0 0.0
    %137 = vmatprep.subr.mxu0 0.0
    %138 = vmatpush1.msra.mxu0 0.0
    %139 = vmatprep.subr.mxu0 0.0
    %140 = vmatpush1.msra.mxu0 0.0
    %141 = vmatprep.subr.mxu0 0.0
    %142 = vmatpush1.msra.mxu0 0.0
    %143 = vmatprep.subr.mxu0 0.0
    %144 = vmatpush1.msra.mxu0 0.0
    %145 = vmatprep.subr.mxu0 0.0
    %146 = vmatpush1.msra.mxu0 0.0
    %147 = vmatprep.subr.mxu0 0.0
    %148 = vmatpush1.msra.mxu0 0.0
    %149 = vmatprep.subr.mxu0 0.0
    %150 = vmatpush1.msra.mxu0 0.0
    %151 = vmatprep.subr.mxu0 0.0
    %152 = vmatpush1.msra.mxu0 0.0
    %153 = vmatprep.subr.mxu0 0.0
    %154 = vmatpush1.msra.mxu0 0.0
    %155 = vmatprep.subr.mxu0 0.0
    %156 = vmatpush1.msra.mxu0 0.0
    %157 = vmatprep.mubr.f32.mxu0 0.0
    %158 = vmatmul.mubr.f32.gmra.mrb[0].mxu0 %v88
    %v159 = vpop.f32.mrb[0].mxu0
    %v160 = vadd.f32 %v85, %v159
    %v161 = vpop.f32.mrb[0].mxu0
    %162 = vmatprep.mubr.f32.mxu0 0.0
    %163 = vmatmul.mubr.f32.gmra.mrb[0].mxu0 %v91
    %v164 = vpop.f32.mrb[0].mxu0
    %v165 = vadd.f32 %v85, %v164
    %v166 = vpop.f32.mrb[0].mxu0
    %167 = vdwg.mxu0
    %v168 = vlaneseq
    %v169 = vshrl.u32 %v168, 7
    %v170 = vsub.s32 0, %v169
    %v171 = vrot.slane %v74, %v170
    %v173 = vsel %vm86, %v35, 0
    %v176 = vsel %vm86, %v36, 0
    %178 = vmatprep.subr.mxu0 0.0
    %179 = vmatpush1.msra.mxu0 %v45
    %180 = vmatprep.subr.mxu0 0.0
    %181 = vmatpush1.msra.mxu0 %v46
    %182 = vmatprep.subr.mxu0 0.0
    %183 = vmatpush1.msra.mxu0 %v47
    %184 = vmatprep.subr.mxu0 0.0
    %185 = vmatpush1.msra.mxu0 %v48
    %186 = vmatprep.subr.mxu0 0.0
    %187 = vmatpush1.msra.mxu0 0.0
    %188 = vmatprep.subr.mxu0 0.0
    %189 = vmatpush1.msra.mxu0 0.0
    %190 = vmatprep.subr.mxu0 0.0
    %191 = vmatpush1.msra.mxu0 0.0
    %192 = vmatprep.subr.mxu0 0.0
    %193 = vmatpush1.msra.mxu0 0.0
    %194 = vmatprep.subr.mxu0 0.0
    %195 = vmatpush1.msra.mxu0 0.0
    %196 = vmatprep.subr.mxu0 0.0
    %197 = vmatpush1.msra.mxu0 0.0
    %198 = vmatprep.subr.mxu0 0.0
    %199 = vmatpush1.msra.mxu0 0.0
    %200 = vmatprep.subr.mxu0 0.0
    %201 = vmatpush1.msra.mxu0 0.0
    %202 = vmatprep.subr.mxu0 0.0
    %203 = vmatpush1.msra.mxu0 0.0
    %204 = vmatprep.subr.mxu0 0.0
    %205 = vmatpush1.msra.mxu0 0.0
    %206 = vmatprep.subr.mxu0 0.0
    %207 = vmatpush1.msra.mxu0 0.0
    %208 = vmatprep.subr.mxu0 0.0
    %209 = vmatpush1.msra.mxu0 0.0
    %210 = vmatprep.subr.mxu0 0.0
    %211 = vmatpush1.msra.mxu0 0.0
    %212 = vmatprep.subr.mxu0 0.0
    %213 = vmatpush1.msra.mxu0 0.0
    %214 = vmatprep.subr.mxu0 0.0
    %215 = vmatpush1.msra.mxu0 0.0
    %216 = vmatprep.subr.mxu0 0.0
    %217 = vmatpush1.msra.mxu0 0.0
    %218 = vmatprep.subr.mxu0 0.0
    %219 = vmatpush1.msra.mxu0 0.0
    %220 = vmatprep.subr.mxu0 0.0
    %221 = vmatpush1.msra.mxu0 0.0
    %222 = vmatprep.subr.mxu0 0.0
    %223 = vmatpush1.msra.mxu0 0.0
    %224 = vmatprep.subr.mxu0 0.0
    %225 = vmatpush1.msra.mxu0 0.0
    %226 = vmatprep.subr.mxu0 0.0
    %227 = vmatpush1.msra.mxu0 0.0
    %228 = vmatprep.subr.mxu0 0.0
    %229 = vmatpush1.msra.mxu0 0.0
    %230 = vmatprep.subr.mxu0 0.0
    %231 = vmatpush1.msra.mxu0 0.0
    %232 = vmatprep.subr.mxu0 0.0
    %233 = vmatpush1.msra.mxu0 0.0
    %234 = vmatprep.subr.mxu0 0.0
    %235 = vmatpush1.msra.mxu0 0.0
    %236 = vmatprep.subr.mxu0 0.0
    %237 = vmatpush1.msra.mxu0 0.0
    %238 = vmatprep.subr.mxu0 0.0
    %239 = vmatpush1.msra.mxu0 0.0
    %240 = vmatprep.subr.mxu0 0.0
    %241 = vmatpush1.msra.mxu0 0.0
    %242 = vmatprep.mubr.f32.mxu0 0.0
    %243 = vmatmul.mubr.f32.gmra.mrb[0].mxu0 %v173
    %v244 = vpop.f32.mrb[0].mxu0
    %v245 = vadd.f32 %v171, %v244
    %v246 = vpop.f32.mrb[0].mxu0
    %247 = vmatprep.mubr.f32.mxu0 0.0
    %248 = vmatmul.mubr.f32.gmra.mrb[0].mxu0 %v176
    %v249 = vpop.f32.mrb[0].mxu0
    %v250 = vadd.f32 %v171, %v249
    %v251 = vpop.f32.mrb[0].mxu0
    %252 = vdwg.mxu0
    %v253 = vlaneseq
    %v254 = vshrl.u32 %v253, 7
    %v255 = vadd.s32 %v254, 8
    %v256 = vadd.s32 %v254, 16
    %v257 = vadd.s32 %v254, 24
    %v258 = vlaneseq
    %v259 = vand.u32 %v258, 127
    %v260 = vshra.s32 %v254, 3
    %v261 = vshra.s32 %v255, 3
    %v262 = vshra.s32 %v256, 3
    %v263 = vshra.s32 %v257, 3
    %v264 = vshra.s32 %v259, 3
    %vm265 = vcmp.eq.s32.totalorder %v260, %v264
    %vm266 = vcmp.eq.s32.totalorder %v261, %v264
    %vm267 = vcmp.eq.s32.totalorder %v262, %v264
    %vm268 = vcmp.eq.s32.totalorder %v263, %v264
    %v269 = vsel %vm265, 1.0, 0.0
    %v270 = vsel %vm266, 1.0, 0.0
    %v271 = vsel %vm267, 1.0, 0.0
    %v272 = vsel %vm268, 1.0, 0.0
    %277 = vrot.lane.b32.xlu0 %v269, 32
    %v278 = vpop.permute.xlu0 %277
    %279 = vrot.lane.b32.xlu0 %v270, 32
    %v280 = vpop.permute.xlu0 %279
    %281 = vrot.lane.b32.xlu0 %v271, 32
    %v282 = vpop.permute.xlu0 %281
    %283 = vrot.lane.b32.xlu0 %v272, 32
    %v284 = vpop.permute.xlu0 %283
    %v289 = vmul.f32 %v160, %v278
    %v290 = vmul.f32 %v160, %v280
    %v291 = vmul.f32 %v160, %v282
    %v292 = vmul.f32 %v160, %v284
    %297 = vrot.lane.b32.xlu0 %v289, 96
    %v298 = vpop.permute.xlu0 %297
    %299 = vrot.lane.b32.xlu0 %v290, 96
    %v300 = vpop.permute.xlu0 %299
    %301 = vrot.lane.b32.xlu0 %v291, 96
    %v302 = vpop.permute.xlu0 %301
    %303 = vrot.lane.b32.xlu0 %v292, 96
    %v304 = vpop.permute.xlu0 %303
    %v306 = vsel %vm86, %v160, 0
    %v308 = vsel %vm86, %v298, 0
    %v310 = vsel %vm86, %v300, 0
    %v312 = vsel %vm86, %v302, 0
    %v314 = vsel %vm86, %v304, 0
    %316 = vmatprep.subr.mxu0 0.0
    %317 = vmatpush1.xpose.msra.mxu0 %v308
    %318 = vmatprep.subr.mxu0 0.0
    %319 = vmatpush1.xpose.msra.mxu0 %v310
    %320 = vmatprep.subr.mxu0 0.0
    %321 = vmatpush1.xpose.msra.mxu0 %v312
    %322 = vmatprep.subr.mxu0 0.0
    %323 = vmatpush1.xpose.msra.mxu0 %v314
    %324 = vmatprep.subr.mxu0 0.0
    %325 = vmatpush1.xpose.msra.mxu0 0.0
    %326 = vmatprep.subr.mxu0 0.0
    %327 = vmatpush1.xpose.msra.mxu0 0.0
    %328 = vmatprep.subr.mxu0 0.0
    %329 = vmatpush1.xpose.msra.mxu0 0.0
    %330 = vmatprep.subr.mxu0 0.0
    %331 = vmatpush1.xpose.msra.mxu0 0.0
    %332 = vmatprep.subr.mxu0 0.0
    %333 = vmatpush1.xpose.msra.mxu0 0.0
    %334 = vmatprep.subr.mxu0 0.0
    %335 = vmatpush1.xpose.msra.mxu0 0.0
    %336 = vmatprep.subr.mxu0 0.0
    %337 = vmatpush1.xpose.msra.mxu0 0.0
    %338 = vmatprep.subr.mxu0 0.0
    %339 = vmatpush1.xpose.msra.mxu0 0.0
    %340 = vmatprep.subr.mxu0 0.0
    %341 = vmatpush1.xpose.msra.mxu0 0.0
    %342 = vmatprep.subr.mxu0 0.0
    %343 = vmatpush1.xpose.msra.mxu0 0.0
    %344 = vmatprep.subr.mxu0 0.0
    %345 = vmatpush1.xpose.msra.mxu0 0.0
    %346 = vmatprep.subr.mxu0 0.0
    %347 = vmatpush1.xpose.msra.mxu0 0.0
    %348 = vmatprep.subr.mxu0 0.0
    %349 = vmatpush1.xpose.msra.mxu0 0.0
    %350 = vmatprep.subr.mxu0 0.0
    %351 = vmatpush1.xpose.msra.mxu0 0.0
    %352 = vmatprep.subr.mxu0 0.0
    %353 = vmatpush1.xpose.msra.mxu0 0.0
    %354 = vmatprep.subr.mxu0 0.0
    %355 = vmatpush1.xpose.msra.mxu0 0.0
    %356 = vmatprep.subr.mxu0 0.0
    %357 = vmatpush1.xpose.msra.mxu0 0.0
    %358 = vmatprep.subr.mxu0 0.0
    %359 = vmatpush1.xpose.msra.mxu0 0.0
    %360 = vmatprep.subr.mxu0 0.0
    %361 = vmatpush1.xpose.msra.mxu0 0.0
    %362 = vmatprep.subr.mxu0 0.0
    %363 = vmatpush1.xpose.msra.mxu0 0.0
    %364 = vmatprep.subr.mxu0 0.0
    %365 = vmatpush1.xpose.msra.mxu0 0.0
    %366 = vmatprep.subr.mxu0 0.0
    %367 = vmatpush1.xpose.msra.mxu0 0.0
    %368 = vmatprep.subr.mxu0 0.0
    %369 = vmatpush1.xpose.msra.mxu0 0.0
    %370 = vmatprep.subr.mxu0 0.0
    %371 = vmatpush1.xpose.msra.mxu0 0.0
    %372 = vmatprep.subr.mxu0 0.0
    %373 = vmatpush1.xpose.msra.mxu0 0.0
    %374 = vmatprep.subr.mxu0 0.0
    %375 = vmatpush1.xpose.msra.mxu0 0.0
    %376 = vmatprep.subr.mxu0 0.0
    %377 = vmatpush1.xpose.msra.mxu0 0.0
    %378 = vmatprep.subr.mxu0 0.0
    %379 = vmatpush1.xpose.msra.mxu0 0.0
    %380 = vmatprep.mubr.f32.mxu0 0.0
    %381 = vmatmul.mubr.f32.gmra.mrb[0].mxu0 %v306
    %v382 = vpop.f32.mrb[0].mxu0
    %v383 = vadd.f32 0.0, %v382
    %v384 = vpop.f32.mrb[0].mxu0
    %385 = vdwg.mxu0
    %v386 = vmul.f32 %v165, %v278
    %v387 = vmul.f32 %v165, %v280
    %v388 = vmul.f32 %v165, %v282
    %v389 = vmul.f32 %v165, %v284
    %394 = vrot.lane.b32.xlu0 %v386, 96
    %v395 = vpop.permute.xlu0 %394
    %396 = vrot.lane.b32.xlu0 %v387, 96
    %v397 = vpop.permute.xlu0 %396
    %398 = vrot.lane.b32.xlu0 %v388, 96
    %v399 = vpop.permute.xlu0 %398
    %400 = vrot.lane.b32.xlu0 %v389, 96
    %v401 = vpop.permute.xlu0 %400
    %v403 = vsel %vm86, %v165, 0
    %v405 = vsel %vm86, %v395, 0
    %v407 = vsel %vm86, %v397, 0
    %v409 = vsel %vm86, %v399, 0
    %v411 = vsel %vm86, %v401, 0
    %413 = vmatprep.subr.mxu0 0.0
    %414 = vmatpush1.xpose.msra.mxu0 %v405
    %415 = vmatprep.subr.mxu0 0.0
    %416 = vmatpush1.xpose.msra.mxu0 %v407
    %417 = vmatprep.subr.mxu0 0.0
    %418 = vmatpush1.xpose.msra.mxu0 %v409
    %419 = vmatprep.subr.mxu0 0.0
    %420 = vmatpush1.xpose.msra.mxu0 %v411
    %421 = vmatprep.subr.mxu0 0.0
    %422 = vmatpush1.xpose.msra.mxu0 0.0
    %423 = vmatprep.subr.mxu0 0.0
    %424 = vmatpush1.xpose.msra.mxu0 0.0
    %425 = vmatprep.subr.mxu0 0.0
    %426 = vmatpush1.xpose.msra.mxu0 0.0
    %427 = vmatprep.subr.mxu0 0.0
    %428 = vmatpush1.xpose.msra.mxu0 0.0
    %429 = vmatprep.subr.mxu0 0.0
    %430 = vmatpush1.xpose.msra.mxu0 0.0
    %431 = vmatprep.subr.mxu0 0.0
    %432 = vmatpush1.xpose.msra.mxu0 0.0
    %433 = vmatprep.subr.mxu0 0.0
    %434 = vmatpush1.xpose.msra.mxu0 0.0
    %435 = vmatprep.subr.mxu0 0.0
    %436 = vmatpush1.xpose.msra.mxu0 0.0
    %437 = vmatprep.subr.mxu0 0.0
    %438 = vmatpush1.xpose.msra.mxu0 0.0
    %439 = vmatprep.subr.mxu0 0.0
    %440 = vmatpush1.xpose.msra.mxu0 0.0
    %441 = vmatprep.subr.mxu0 0.0
    %442 = vmatpush1.xpose.msra.mxu0 0.0
    %443 = vmatprep.subr.mxu0 0.0
    %444 = vmatpush1.xpose.msra.mxu0 0.0
    %445 = vmatprep.subr.mxu0 0.0
    %446 = vmatpush1.xpose.msra.mxu0 0.0
    %447 = vmatprep.subr.mxu0 0.0
    %448 = vmatpush1.xpose.msra.mxu0 0.0
    %449 = vmatprep.subr.mxu0 0.0
    %450 = vmatpush1.xpose.msra.mxu0 0.0
    %451 = vmatprep.subr.mxu0 0.0
    %452 = vmatpush1.xpose.msra.mxu0 0.0
    %453 = vmatprep.subr.mxu0 0.0
    %454 = vmatpush1.xpose.msra.mxu0 0.0
    %455 = vmatprep.subr.mxu0 0.0
    %456 = vmatpush1.xpose.msra.mxu0 0.0
    %457 = vmatprep.subr.mxu0 0.0
    %458 = vmatpush1.xpose.msra.mxu0 0.0
    %459 = vmatprep.subr.mxu0 0.0
    %460 = vmatpush1.xpose.msra.mxu0 0.0
    %461 = vmatprep.subr.mxu0 0.0
    %462 = vmatpush1.xpose.msra.mxu0 0.0
    %463 = vmatprep.subr.mxu0 0.0
    %464 = vmatpush1.xpose.msra.mxu0 0.0
    %465 = vmatprep.subr.mxu0 0.0
    %466 = vmatpush1.xpose.msra.mxu0 0.0
    %467 = vmatprep.subr.mxu0 0.0
    %468 = vmatpush1.xpose.msra.mxu0 0.0
    %469 = vmatprep.subr.mxu0 0.0
    %470 = vmatpush1.xpose.msra.mxu0 0.0
    %471 = vmatprep.subr.mxu0 0.0
    %472 = vmatpush1.xpose.msra.mxu0 0.0
    %473 = vmatprep.subr.mxu0 0.0
    %474 = vmatpush1.xpose.msra.mxu0 0.0
    %475 = vmatprep.subr.mxu0 0.0
    %476 = vmatpush1.xpose.msra.mxu0 0.0
    %477 = vmatprep.mubr.f32.mxu0 0.0
    %478 = vmatmul.mubr.f32.gmra.mrb[0].mxu0 %v403
    %v479 = vpop.f32.mrb[0].mxu0
    %v480 = vadd.f32 0.0, %v479
    %v481 = vpop.f32.mrb[0].mxu0
    %482 = vdwg.mxu0
    %v483 = vsel %vm86, %v383, -inf
    %484 = vmax.xlane.f32.xlu0 %v483
    %v485 = vpop.xlane.xlu0 %484
    %v486 = vsel %vm86, %v480, -inf
    %487 = vmax.xlane.f32.xlu0 %v486
    %v488 = vpop.xlane.xlu0 %487
    %v489 = vsub.f32 %v383, %v485
    %v490 = vsub.f32 %v480, %v488
    %v491 = vmul.f32 %v489, 1.442695
    %v492 = vpow.pop %v491
    %v493 = vmul.f32 %v490, 1.442695
    %v494 = vpow.pop %v493
    %v496 = vsel %vm86, %v492, 0
    %v499 = vsel %vm86, %v494, 0
    %501 = vmatprep.subr.mxu0 0.0
    %502 = vmatpush1.msra.mxu0 %v269
    %503 = vmatprep.subr.mxu0 0.0
    %504 = vmatpush1.msra.mxu0 %v270
    %505 = vmatprep.subr.mxu0 0.0
    %506 = vmatpush1.msra.mxu0 %v271
    %507 = vmatprep.subr.mxu0 0.0
    %508 = vmatpush1.msra.mxu0 %v272
    %509 = vmatprep.subr.mxu0 0.0
    %510 = vmatpush1.msra.mxu0 0.0
    %511 = vmatprep.subr.mxu0 0.0
    %512 = vmatpush1.msra.mxu0 0.0
    %513 = vmatprep.subr.mxu0 0.0
    %514 = vmatpush1.msra.mxu0 0.0
    %515 = vmatprep.subr.mxu0 0.0
    %516 = vmatpush1.msra.mxu0 0.0
    %517 = vmatprep.subr.mxu0 0.0
    %518 = vmatpush1.msra.mxu0 0.0
    %519 = vmatprep.subr.mxu0 0.0
    %520 = vmatpush1.msra.mxu0 0.0
    %521 = vmatprep.subr.mxu0 0.0
    %522 = vmatpush1.msra.mxu0 0.0
    %523 = vmatprep.subr.mxu0 0.0
    %524 = vmatpush1.msra.mxu0 0.0
    %525 = vmatprep.subr.mxu0 0.0
    %526 = vmatpush1.msra.mxu0 0.0
    %527 = vmatprep.subr.mxu0 0.0
    %528 = vmatpush1.msra.mxu0 0.0
    %529 = vmatprep.subr.mxu0 0.0
    %530 = vmatpush1.msra.mxu0 0.0
    %531 = vmatprep.subr.mxu0 0.0
    %532 = vmatpush1.msra.mxu0 0.0
    %533 = vmatprep.subr.mxu0 0.0
    %534 = vmatpush1.msra.mxu0 0.0
    %535 = vmatprep.subr.mxu0 0.0
    %536 = vmatpush1.msra.mxu0 0.0
    %537 = vmatprep.subr.mxu0 0.0
    %538 = vmatpush1.msra.mxu0 0.0
    %539 = vmatprep.subr.mxu0 0.0
    %540 = vmatpush1.msra.mxu0 0.0
    %541 = vmatprep.subr.mxu0 0.0
    %542 = vmatpush1.msra.mxu0 0.0
    %543 = vmatprep.subr.mxu0 0.0
    %544 = vmatpush1.msra.mxu0 0.0
    %545 = vmatprep.subr.mxu0 0.0
    %546 = vmatpush1.msra.mxu0 0.0
    %547 = vmatprep.subr.mxu0 0.0
    %548 = vmatpush1.msra.mxu0 0.0
    %549 = vmatprep.subr.mxu0 0.0
    %550 = vmatpush1.msra.mxu0 0.0
    %551 = vmatprep.subr.mxu0 0.0
    %552 = vmatpush1.msra.mxu0 0.0
    %553 = vmatprep.subr.mxu0 0.0
    %554 = vmatpush1.msra.mxu0 0.0
    %555 = vmatprep.subr.mxu0 0.0
    %556 = vmatpush1.msra.mxu0 0.0
    %557 = vmatprep.subr.mxu0 0.0
    %558 = vmatpush1.msra.mxu0 0.0
    %559 = vmatprep.subr.mxu0 0.0
    %560 = vmatpush1.msra.mxu0 0.0
    %561 = vmatprep.subr.mxu0 0.0
    %562 = vmatpush1.msra.mxu0 0.0
    %563 = vmatprep.subr.mxu0 0.0
    %564 = vmatpush1.msra.mxu0 0.0
    %565 = vmatprep.mubr.f32.mxu0 0.0
    %566 = vmatmul.mubr.f32.gmra.mrb[0].mxu0 %v496
    %v567 = vpop.f32.mrb[0].mxu0
    %v568 = vadd.f32 0.0, %v567
    %v569 = vpop.f32.mrb[0].mxu0
    %570 = vmatprep.mubr.f32.mxu0 0.0
    %571 = vmatmul.mubr.f32.gmra.mrb[0].mxu0 %v499
    %v572 = vpop.f32.mrb[0].mxu0
    %v573 = vadd.f32 0.0, %v572
    %v574 = vpop.f32.mrb[0].mxu0
    %575 = vdwg.mxu0
    %v576 = vrcp.pop %v568
    %v577 = vmul.f32 %v492, %v576
    %v578 = vrcp.pop %v573
    %v579 = vmul.f32 %v494, %v578
    %v580 = vmul.f32 %v245, %v269
    %v581 = vmul.f32 %v245, %v270
    %v582 = vmul.f32 %v245, %v271
    %v583 = vmul.f32 %v245, %v272
    %v585 = vsel %vm86, %v577, 0
    %587 = vmatprep.subr.mxu0 0.0
    %588 = vmatpush1.msra.mxu0 %v580
    %589 = vmatprep.subr.mxu0 0.0
    %590 = vmatpush1.msra.mxu0 %v581
    %591 = vmatprep.subr.mxu0 0.0
    %592 = vmatpush1.msra.mxu0 %v582
    %593 = vmatprep.subr.mxu0 0.0
    %594 = vmatpush1.msra.mxu0 %v583
    %595 = vmatprep.subr.mxu0 0.0
    %596 = vmatpush1.msra.mxu0 0.0
    %597 = vmatprep.subr.mxu0 0.0
    %598 = vmatpush1.msra.mxu0 0.0
    %599 = vmatprep.subr.mxu0 0.0
    %600 = vmatpush1.msra.mxu0 0.0
    %601 = vmatprep.subr.mxu0 0.0
    %602 = vmatpush1.msra.mxu0 0.0
    %603 = vmatprep.subr.mxu0 0.0
    %604 = vmatpush1.msra.mxu0 0.0
    %605 = vmatprep.subr.mxu0 0.0
    %606 = vmatpush1.msra.mxu0 0.0
    %607 = vmatprep.subr.mxu0 0.0
    %608 = vmatpush1.msra.mxu0 0.0
    %609 = vmatprep.subr.mxu0 0.0
    %610 = vmatpush1.msra.mxu0 0.0
    %611 = vmatprep.subr.mxu0 0.0
    %612 = vmatpush1.msra.mxu0 0.0
    %613 = vmatprep.subr.mxu0 0.0
    %614 = vmatpush1.msra.mxu0 0.0
    %615 = vmatprep.subr.mxu0 0.0
    %616 = vmatpush1.msra.mxu0 0.0
    %617 = vmatprep.subr.mxu0 0.0
    %618 = vmatpush1.msra.mxu0 0.0
    %619 = vmatprep.subr.mxu0 0.0
    %620 = vmatpush1.msra.mxu0 0.0
    %621 = vmatprep.subr.mxu0 0.0
    %622 = vmatpush1.msra.mxu0 0.0
    %623 = vmatprep.subr.mxu0 0.0
    %624 = vmatpush1.msra.mxu0 0.0
    %625 = vmatprep.subr.mxu0 0.0
    %626 = vmatpush1.msra.mxu0 0.0
    %627 = vmatprep.subr.mxu0 0.0
    %628 = vmatpush1.msra.mxu0 0.0
    %629 = vmatprep.subr.mxu0 0.0
    %630 = vmatpush1.msra.mxu0 0.0
    %631 = vmatprep.subr.mxu0 0.0
    %632 = vmatpush1.msra.mxu0 0.0
    %633 = vmatprep.subr.mxu0 0.0
    %634 = vmatpush1.msra.mxu0 0.0
    %635 = vmatprep.subr.mxu0 0.0
    %636 = vmatpush1.msra.mxu0 0.0
    %637 = vmatprep.subr.mxu0 0.0
    %638 = vmatpush1.msra.mxu0 0.0
    %639 = vmatprep.subr.mxu0 0.0
    %640 = vmatpush1.msra.mxu0 0.0
    %641 = vmatprep.subr.mxu0 0.0
    %642 = vmatpush1.msra.mxu0 0.0
    %643 = vmatprep.subr.mxu0 0.0
    %644 = vmatpush1.msra.mxu0 0.0
    %645 = vmatprep.subr.mxu0 0.0
    %646 = vmatpush1.msra.mxu0 0.0
    %647 = vmatprep.subr.mxu0 0.0
    %648 = vmatpush1.msra.mxu0 0.0
    %649 = vmatprep.subr.mxu0 0.0
    %650 = vmatpush1.msra.mxu0 0.0
    %651 = vmatprep.mubr.f32.mxu0 0.0
    %652 = vmatmul.mubr.f32.gmra.mrb[0].mxu0 %v585
    %v653 = vpop.f32.mrb[0].mxu0
    %v654 = vadd.f32 0.0, %v653
    %v655 = vpop.f32.mrb[0].mxu0
    %656 = vdwg.mxu0
    %v657 = vmul.f32 %v250, %v269
    %v658 = vmul.f32 %v250, %v270
    %v659 = vmul.f32 %v250, %v271
    %v660 = vmul.f32 %v250, %v272
    %v662 = vsel %vm86, %v579, 0
    %664 = vmatprep.subr.mxu0 0.0
    %665 = vmatpush1.msra.mxu0 %v657
    %666 = vmatprep.subr.mxu0 0.0
    %667 = vmatpush1.msra.mxu0 %v658
    %668 = vmatprep.subr.mxu0 0.0
    %669 = vmatpush1.msra.mxu0 %v659
    %670 = vmatprep.subr.mxu0 0.0
    %671 = vmatpush1.msra.mxu0 %v660
    %672 = vmatprep.subr.mxu0 0.0
    %673 = vmatpush1.msra.mxu0 0.0
    %674 = vmatprep.subr.mxu0 0.0
    %675 = vmatpush1.msra.mxu0 0.0
    %676 = vmatprep.subr.mxu0 0.0
    %677 = vmatpush1.msra.mxu0 0.0
    %678 = vmatprep.subr.mxu0 0.0
    %679 = vmatpush1.msra.mxu0 0.0
    %680 = vmatprep.subr.mxu0 0.0
    %681 = vmatpush1.msra.mxu0 0.0
    %682 = vmatprep.subr.mxu0 0.0
    %683 = vmatpush1.msra.mxu0 0.0
    %684 = vmatprep.subr.mxu0 0.0
    %685 = vmatpush1.msra.mxu0 0.0
    %686 = vmatprep.subr.mxu0 0.0
    %687 = vmatpush1.msra.mxu0 0.0
    %688 = vmatprep.subr.mxu0 0.0
    %689 = vmatpush1.msra.mxu0 0.0
    %690 = vmatprep.subr.mxu0 0.0
    %691 = vmatpush1.msra.mxu0 0.0
    %692 = vmatprep.subr.mxu0 0.0
    %693 = vmatpush1.msra.mxu0 0.0
    %694 = vmatprep.subr.mxu0 0.0
    %695 = vmatpush1.msra.mxu0 0.0
    %696 = vmatprep.subr.mxu0 0.0
    %697 = vmatpush1.msra.mxu0 0.0
    %698 = vmatprep.subr.mxu0 0.0
    %699 = vmatpush1.msra.mxu0 0.0
    %700 = vmatprep.subr.mxu0 0.0
    %701 = vmatpush1.msra.mxu0 0.0
    %702 = vmatprep.subr.mxu0 0.0
    %703 = vmatpush1.msra.mxu0 0.0
    %704 = vmatprep.subr.mxu0 0.0
    %705 = vmatpush1.msra.mxu0 0.0
    %706 = vmatprep.subr.mxu0 0.0
    %707 = vmatpush1.msra.mxu0 0.0
    %708 = vmatprep.subr.mxu0 0.0
    %709 = vmatpush1.msra.mxu0 0.0
    %710 = vmatprep.subr.mxu0 0.0
    %711 = vmatpush1.msra.mxu0 0.0
    %712 = vmatprep.subr.mxu0 0.0
    %713 = vmatpush1.msra.mxu0 0.0
    %714 = vmatprep.subr.mxu0 0.0
    %715 = vmatpush1.msra.mxu0 0.0
    %716 = vmatprep.subr.mxu0 0.0
    %717 = vmatpush1.msra.mxu0 0.0
    %718 = vmatprep.subr.mxu0 0.0
    %719 = vmatpush1.msra.mxu0 0.0
    %720 = vmatprep.subr.mxu0 0.0
    %721 = vmatpush1.msra.mxu0 0.0
    %722 = vmatprep.subr.mxu0 0.0
    %723 = vmatpush1.msra.mxu0 0.0
    %724 = vmatprep.subr.mxu0 0.0
    %725 = vmatpush1.msra.mxu0 0.0
    %726 = vmatprep.subr.mxu0 0.0
    %727 = vmatpush1.msra.mxu0 0.0
    %728 = vmatprep.mubr.f32.mxu0 0.0
    %729 = vmatmul.mubr.f32.gmra.mrb[0].mxu0 %v662
    %v730 = vpop.f32.mrb[0].mxu0
    %v731 = vadd.f32 0.0, %v730
    %v732 = vpop.f32.mrb[0].mxu0
    %733 = vdwg.mxu0
    %v734 = vlaneseq
    %v735 = vshrl.u32 %v734, 7
    %v736 = vsub.s32 0, %v735
    %v737 = vrot.slane %v75, %v736
    %v739 = vsel %vm86, %v654, 0
    %v742 = vsel %vm86, %v731, 0
    %744 = vmatprep.subr.mxu0 0.0
    %745 = vmatpush1.msra.mxu0 %v49
    %746 = vmatprep.subr.mxu0 0.0
    %747 = vmatpush1.msra.mxu0 %v50
    %748 = vmatprep.subr.mxu0 0.0
    %749 = vmatpush1.msra.mxu0 %v51
    %750 = vmatprep.subr.mxu0 0.0
    %751 = vmatpush1.msra.mxu0 %v52
    %752 = vmatprep.subr.mxu0 0.0
    %753 = vmatpush1.msra.mxu0 0.0
    %754 = vmatprep.subr.mxu0 0.0
    %755 = vmatpush1.msra.mxu0 0.0
    %756 = vmatprep.subr.mxu0 0.0
    %757 = vmatpush1.msra.mxu0 0.0
    %758 = vmatprep.subr.mxu0 0.0
    %759 = vmatpush1.msra.mxu0 0.0
    %760 = vmatprep.subr.mxu0 0.0
    %761 = vmatpush1.msra.mxu0 0.0
    %762 = vmatprep.subr.mxu0 0.0
    %763 = vmatpush1.msra.mxu0 0.0
    %764 = vmatprep.subr.mxu0 0.0
    %765 = vmatpush1.msra.mxu0 0.0
    %766 = vmatprep.subr.mxu0 0.0
    %767 = vmatpush1.msra.mxu0 0.0
    %768 = vmatprep.subr.mxu0 0.0
    %769 = vmatpush1.msra.mxu0 0.0
    %770 = vmatprep.subr.mxu0 0.0
    %771 = vmatpush1.msra.mxu0 0.0
    %772 = vmatprep.subr.mxu0 0.0
    %773 = vmatpush1.msra.mxu0 0.0
    %774 = vmatprep.subr.mxu0 0.0
    %775 = vmatpush1.msra.mxu0 0.0
    %776 = vmatprep.subr.mxu0 0.0
    %777 = vmatpush1.msra.mxu0 0.0
    %778 = vmatprep.subr.mxu0 0.0
    %779 = vmatpush1.msra.mxu0 0.0
    %780 = vmatprep.subr.mxu0 0.0
    %781 = vmatpush1.msra.mxu0 0.0
    %782 = vmatprep.subr.mxu0 0.0
    %783 = vmatpush1.msra.mxu0 0.0
    %784 = vmatprep.subr.mxu0 0.0
    %785 = vmatpush1.msra.mxu0 0.0
    %786 = vmatprep.subr.mxu0 0.0
    %787 = vmatpush1.msra.mxu0 0.0
    %788 = vmatprep.subr.mxu0 0.0
    %789 = vmatpush1.msra.mxu0 0.0
    %790 = vmatprep.subr.mxu0 0.0
    %791 = vmatpush1.msra.mxu0 0.0
    %792 = vmatprep.subr.mxu0 0.0
    %793 = vmatpush1.msra.mxu0 0.0
    %794 = vmatprep.subr.mxu0 0.0
    %795 = vmatpush1.msra.mxu0 0.0
    %796 = vmatprep.subr.mxu0 0.0
    %797 = vmatpush1.msra.mxu0 0.0
    %798 = vmatprep.subr.mxu0 0.0
    %799 = vmatpush1.msra.mxu0 0.0
    %800 = vmatprep.subr.mxu0 0.0
    %801 = vmatpush1.msra.mxu0 0.0
    %802 = vmatprep.subr.mxu0 0.0
    %803 = vmatpush1.msra.mxu0 0.0
    %804 = vmatprep.subr.mxu0 0.0
    %805 = vmatpush1.msra.mxu0 0.0
    %806 = vmatprep.subr.mxu0 0.0
    %807 = vmatpush1.msra.mxu0 0.0
    %808 = vmatprep.mubr.f32.mxu0 0.0
    %809 = vmatmul.mubr.f32.gmra.mrb[0].mxu0 %v739
    %v810 = vpop.f32.mrb[0].mxu0
    %v811 = vadd.f32 %v737, %v810
    %v812 = vpop.f32.mrb[0].mxu0
    %813 = vmatprep.mubr.f32.mxu0 0.0
    %814 = vmatmul.mubr.f32.gmra.mrb[0].mxu0 %v742
    %v815 = vpop.f32.mrb[0].mxu0
    %v816 = vadd.f32 %v737, %v815
    %v817 = vpop.f32.mrb[0].mxu0
    %818 = vdwg.mxu0
    %v819 = vadd.f32 %v35, %v811
    %v820 = vadd.f32 %v36, %v816
    %v821 = vsel %vm86, %v819, 0.0
    %822 = vadd.xlane.f32.xlu0 %v821
    %v823 = vpop.xlane.xlu0 %822
    %v824 = vsel %vm86, %v820, 0.0
    %825 = vadd.xlane.f32.xlu0 %v824
    %v826 = vpop.xlane.xlu0 %825
    %v827 = vrcp.pop 32.0
    %v828 = vmul.f32 %v823, %v827
    %v829 = vmul.f32 %v826, %v827
    %v830 = vsub.f32 %v819, %v828
    %v831 = vsub.f32 %v820, %v829
    %v832 = vmul.f32 %v830, %v830
    %v833 = vmul.f32 %v831, %v831
    %v834 = vsel %vm86, %v832, 0.0
    %835 = vadd.xlane.f32.xlu0 %v834
    %v836 = vpop.xlane.xlu0 %835
    %v837 = vsel %vm86, %v833, 0.0
    %838 = vadd.xlane.f32.xlu0 %v837
    %v839 = vpop.xlane.xlu0 %838
    %v840 = vmul.f32 %v836, %v827
    %v841 = vmul.f32 %v839, %v827
    %v842 = vadd.f32 %v840, 1e-12
    %v843 = vadd.f32 %v841, 1e-12
    %v844 = vrsqrt.pop %v842
    %v845 = vrsqrt.pop %v843
    %v846 = vmul.f32 %v830, %v844
    %v847 = vmul.f32 %v831, %v845
    %v848 = vlaneseq
    %v849 = vshrl.u32 %v848, 7
    %v850 = vsub.s32 0, %v849
    %v851 = vrot.slane %v76, %v850
    %v852 = vmul.f32 %v846, %v851
    %v853 = vmul.f32 %v847, %v851
    %v854 = vlaneseq
    %v855 = vshrl.u32 %v854, 7
    %v856 = vsub.s32 0, %v855
    %v857 = vrot.slane %v77, %v856
    %v858 = vadd.f32 %v852, %v857
    %v859 = vadd.f32 %v853, %v857
    %v860 = vlaneseq
    %v861 = vshrl.u32 %v860, 7
    %v862 = vsub.s32 0, %v861
    %v863 = vrot.slane %v78, %v862
    %v865 = vsel %vm86, %v858, 0
    %v868 = vsel %vm86, %v859, 0
    %870 = vmatprep.subr.mxu0 0.0
    %871 = vmatpush1.msra.mxu0 %v53
    %872 = vmatprep.subr.mxu0 0.0
    %873 = vmatpush1.msra.mxu0 %v54
    %874 = vmatprep.subr.mxu0 0.0
    %875 = vmatpush1.msra.mxu0 %v55
    %876 = vmatprep.subr.mxu0 0.0
    %877 = vmatpush1.msra.mxu0 %v56
    %878 = vmatprep.subr.mxu0 0.0
    %879 = vmatpush1.msra.mxu0 0.0
    %880 = vmatprep.subr.mxu0 0.0
    %881 = vmatpush1.msra.mxu0 0.0
    %882 = vmatprep.subr.mxu0 0.0
    %883 = vmatpush1.msra.mxu0 0.0
    %884 = vmatprep.subr.mxu0 0.0
    %885 = vmatpush1.msra.mxu0 0.0
    %886 = vmatprep.subr.mxu0 0.0
    %887 = vmatpush1.msra.mxu0 0.0
    %888 = vmatprep.subr.mxu0 0.0
    %889 = vmatpush1.msra.mxu0 0.0
    %890 = vmatprep.subr.mxu0 0.0
    %891 = vmatpush1.msra.mxu0 0.0
    %892 = vmatprep.subr.mxu0 0.0
    %893 = vmatpush1.msra.mxu0 0.0
    %894 = vmatprep.subr.mxu0 0.0
    %895 = vmatpush1.msra.mxu0 0.0
    %896 = vmatprep.subr.mxu0 0.0
    %897 = vmatpush1.msra.mxu0 0.0
    %898 = vmatprep.subr.mxu0 0.0
    %899 = vmatpush1.msra.mxu0 0.0
    %900 = vmatprep.subr.mxu0 0.0
    %901 = vmatpush1.msra.mxu0 0.0
    %902 = vmatprep.subr.mxu0 0.0
    %903 = vmatpush1.msra.mxu0 0.0
    %904 = vmatprep.subr.mxu0 0.0
    %905 = vmatpush1.msra.mxu0 0.0
    %906 = vmatprep.subr.mxu0 0.0
    %907 = vmatpush1.msra.mxu0 0.0
    %908 = vmatprep.subr.mxu0 0.0
    %909 = vmatpush1.msra.mxu0 0.0
    %910 = vmatprep.subr.mxu0 0.0
    %911 = vmatpush1.msra.mxu0 0.0
    %912 = vmatprep.subr.mxu0 0.0
    %913 = vmatpush1.msra.mxu0 0.0
    %914 = vmatprep.subr.mxu0 0.0
    %915 = vmatpush1.msra.mxu0 0.0
    %916 = vmatprep.subr.mxu0 0.0
    %917 = vmatpush1.msra.mxu0 0.0
    %918 = vmatprep.subr.mxu0 0.0
    %919 = vmatpush1.msra.mxu0 0.0
    %920 = vmatprep.subr.mxu0 0.0
    %921 = vmatpush1.msra.mxu0 0.0
    %922 = vmatprep.subr.mxu0 0.0
    %923 = vmatpush1.msra.mxu0 0.0
    %924 = vmatprep.subr.mxu0 0.0
    %925 = vmatpush1.msra.mxu0 0.0
    %926 = vmatprep.subr.mxu0 0.0
    %927 = vmatpush1.msra.mxu0 0.0
    %928 = vmatprep.subr.mxu0 0.0
    %929 = vmatpush1.msra.mxu0 0.0
    %930 = vmatprep.subr.mxu0 0.0
    %931 = vmatpush1.msra.mxu0 0.0
    %932 = vmatprep.subr.mxu0 0.0
    %933 = vmatpush1.msra.mxu0 0.0
    %934 = vmatprep.mubr.f32.mxu0 0.0
    %935 = vmatmul.mubr.f32.gmra.mrb[0].mxu0 %v865
    %v936 = vpop.f32.mrb[0].mxu0
    %v937 = vadd.f32 %v863, %v936
    %v938 = vpop.f32.mrb[0].mxu0
    %939 = vmatprep.mubr.f32.mxu0 0.0
    %940 = vmatmul.mubr.f32.gmra.mrb[0].mxu0 %v868
    %v941 = vpop.f32.mrb[0].mxu0
    %v942 = vadd.f32 %v863, %v941
    %v943 = vpop.f32.mrb[0].mxu0
    %944 = vdwg.mxu0
    %v945 = vmul.f32 %v937, 0.5
    %v946 = vmul.f32 %v942, 0.5
    %v947 = vmul.f32 %v937, 0.70710677
    %v948 = vmul.f32 %v942, 0.70710677
    %v949 = verf.f32.pop %v947
    %v950 = verf.f32.pop %v948
    %v951 = vadd.f32 %v949, 1.0
    %v952 = vadd.f32 %v950, 1.0
    %v953 = vmul.f32 %v945, %v951
    %v954 = vmul.f32 %v946, %v952
    %v955 = vlaneseq
    %v956 = vshrl.u32 %v955, 7
    %v957 = vsub.s32 0, %v956
    %v958 = vrot.slane %v79, %v957
    %959 = vmatprep.subr.mxu0 0.0
    %960 = vmatpush1.msra.mxu0 %v57
    %961 = vmatprep.subr.mxu0 0.0
    %962 = vmatpush1.msra.mxu0 %v58
    %963 = vmatprep.subr.mxu0 0.0
    %964 = vmatpush1.msra.mxu0 %v59
    %965 = vmatprep.subr.mxu0 0.0
    %966 = vmatpush1.msra.mxu0 %v60
    %967 = vmatprep.subr.mxu0 0.0
    %968 = vmatpush1.msra.mxu0 %v61
    %969 = vmatprep.subr.mxu0 0.0
    %970 = vmatpush1.msra.mxu0 %v62
    %971 = vmatprep.subr.mxu0 0.0
    %972 = vmatpush1.msra.mxu0 %v63
    %973 = vmatprep.subr.mxu0 0.0
    %974 = vmatpush1.msra.mxu0 %v64
    %975 = vmatprep.subr.mxu0 0.0
    %976 = vmatpush1.msra.mxu0 %v65
    %977 = vmatprep.subr.mxu0 0.0
    %978 = vmatpush1.msra.mxu0 %v66
    %979 = vmatprep.subr.mxu0 0.0
    %980 = vmatpush1.msra.mxu0 %v67
    %981 = vmatprep.subr.mxu0 0.0
    %982 = vmatpush1.msra.mxu0 %v68
    %983 = vmatprep.subr.mxu0 0.0
    %984 = vmatpush1.msra.mxu0 %v69
    %985 = vmatprep.subr.mxu0 0.0
    %986 = vmatpush1.msra.mxu0 %v70
    %987 = vmatprep.subr.mxu0 0.0
    %988 = vmatpush1.msra.mxu0 %v71
    %989 = vmatprep.subr.mxu0 0.0
    %990 = vmatpush1.msra.mxu0 %v72
    %991 = vmatprep.subr.mxu0 0.0
    %992 = vmatpush1.msra.mxu0 0.0
    %993 = vmatprep.subr.mxu0 0.0
    %994 = vmatpush1.msra.mxu0 0.0
    %995 = vmatprep.subr.mxu0 0.0
    %996 = vmatpush1.msra.mxu0 0.0
    %997 = vmatprep.subr.mxu0 0.0
    %998 = vmatpush1.msra.mxu0 0.0
    %999 = vmatprep.subr.mxu0 0.0
    %1000 = vmatpush1.msra.mxu0 0.0
    %1001 = vmatprep.subr.mxu0 0.0
    %1002 = vmatpush1.msra.mxu0 0.0
    %1003 = vmatprep.subr.mxu0 0.0
    %1004 = vmatpush1.msra.mxu0 0.0
    %1005 = vmatprep.subr.mxu0 0.0
    %1006 = vmatpush1.msra.mxu0 0.0
    %1007 = vmatprep.subr.mxu0 0.0
    %1008 = vmatpush1.msra.mxu0 0.0
    %1009 = vmatprep.subr.mxu0 0.0
    %1010 = vmatpush1.msra.mxu0 0.0
    %1011 = vmatprep.subr.mxu0 0.0
    %1012 = vmatpush1.msra.mxu0 0.0
    %1013 = vmatprep.subr.mxu0 0.0
    %1014 = vmatpush1.msra.mxu0 0.0
    %1015 = vmatprep.subr.mxu0 0.0
    %1016 = vmatpush1.msra.mxu0 0.0
    %1017 = vmatprep.subr.mxu0 0.0
    %1018 = vmatpush1.msra.mxu0 0.0
    %1019 = vmatprep.subr.mxu0 0.0
    %1020 = vmatpush1.msra.mxu0 0.0
    %1021 = vmatprep.subr.mxu0 0.0
    %1022 = vmatpush1.msra.mxu0 0.0
    %1023 = vmatprep.mubr.f32.mxu0 0.0
    %1024 = vmatmul.mubr.f32.gmra.mrb[0].mxu0 %v953
    %v1025 = vpop.f32.mrb[0].mxu0
    %v1026 = vadd.f32 %v958, %v1025
    %v1027 = vpop.f32.mrb[0].mxu0
    %1028 = vmatprep.mubr.f32.mxu0 0.0
    %1029 = vmatmul.mubr.f32.gmra.mrb[0].mxu0 %v954
    %v1030 = vpop.f32.mrb[0].mxu0
    %v1031 = vadd.f32 %v958, %v1030
    %v1032 = vpop.f32.mrb[0].mxu0
    %1033 = vdwg.mxu0
    %v1034 = vadd.f32 %v858, %v1026
    %v1035 = vadd.f32 %v859, %v1031
    %v1036 = vsel %vm86, %v1034, 0.0
    %1037 = vadd.xlane.f32.xlu0 %v1036
    %v1038 = vpop.xlane.xlu0 %1037
    %v1039 = vsel %vm86, %v1035, 0.0
    %1040 = vadd.xlane.f32.xlu0 %v1039
    %v1041 = vpop.xlane.xlu0 %1040
    %v1042 = vmul.f32 %v1038, %v827
    %v1043 = vmul.f32 %v1041, %v827
    %v1044 = vsub.f32 %v1034, %v1042
    %v1045 = vsub.f32 %v1035, %v1043
    %v1046 = vmul.f32 %v1044, %v1044
    %v1047 = vmul.f32 %v1045, %v1045
    %v1048 = vsel %vm86, %v1046, 0.0
    %1049 = vadd.xlane.f32.xlu0 %v1048
    %v1050 = vpop.xlane.xlu0 %1049
    %v1051 = vsel %vm86, %v1047, 0.0
    %1052 = vadd.xlane.f32.xlu0 %v1051
    %v1053 = vpop.xlane.xlu0 %1052
    %v1054 = vmul.f32 %v1050, %v827
    %v1055 = vmul.f32 %v1053, %v827
    %v1056 = vadd.f32 %v1054, 1e-12
    %v1057 = vadd.f32 %v1055, 1e-12
    %v1058 = vrsqrt.pop %v1056
    %v1059 = vrsqrt.pop %v1057
    %v1060 = vmul.f32 %v1044, %v1058
    %v1061 = vmul.f32 %v1045, %v1059
    %v1062 = vlaneseq
    %v1063 = vshrl.u32 %v1062, 7
    %v1064 = vsub.s32 0, %v1063
    %v1065 = vrot.slane %v80, %v1064
    %v1066 = vmul.f32 %v1060, %v1065
    %v1067 = vmul.f32 %v1061, %v1065
    %v1068 = vlaneseq
    %v1069 = vshrl.u32 %v1068, 7
    %v1070 = vsub.s32 0, %v1069
    %v1071 = vrot.slane %v81, %v1070
    %v1072 = vadd.f32 %v1066, %v1071
    %v1073 = vadd.f32 %v1067, %v1071
    %1074 = vst.msk [vmem:[#allocation5] sm:$0xff] %vm86, %v1072
    %1075 = vst.msk [vmem:[#allocation5 + $0x8] sm:$0xff] %vm86, %v1073
    // Predicated region
    $region26: #{tpu_custom_call.1} parent=1 // pred_check
      _
    $region27: #{tpu_custom_call.1} parent=1 // pred_check_branch
      %1077 = sbr.rel (0) target = $region29
    $region28: #{tpu_custom_call.1} parent=1 // pred_region
      %s1079 = ssub.s32 256, 256
      %1080 = vsyncadd [#allocation4], %s1079
      %s1081 = sshll.u32 [#allocation5], 4
      %s1082 = int_to_ptr.vmem [resolvable:$true] %s1081
      %1087 = dma.vmem_to_hbm [thread:$0]  %s1082, 256, %s5, [#allocation4], 128, 128, 8
    $region29: #{tpu_custom_call.1} parent=1 // pred_fallthru
      _
    // Predicated region
    $region30: #{tpu_custom_call.1} parent=1 // pred_check
      _
    $region31: #{tpu_custom_call.1} parent=1 // pred_check_branch
      %1089 = sbr.rel (0) target = $region33
    $region32: #{tpu_custom_call.1} parent=1 // pred_region
      %1090 = dma.done [#allocation4], 256
    $region33: #{tpu_custom_call.1} parent=1 // pred_fallthru
      _
    %1091 = vsyncpa [#allocation3], 1
    %1092 = vsyncpa [#allocation4], 1

</llo_original>
